<compile_context>
chip_gen: v7x
topology: tpu7x:2x2x1
jax: 0.10.0
libtpu: 0.0.40
codegen_flags: <defaults>
</compile_context>

<pallas_src>
import jax
import jax.numpy as jnp
from jax.experimental import pallas as pl
from jax.experimental.pallas import tpu as pltpu


def _round_up(x, m):
    return ((x + m - 1) // m) * m


def _vmem_capacity_bytes():
    """Per-core VMEM capacity; falls back to the smallest (v7x) budget."""
    try:
        return int(pltpu.get_tpu_info().vmem_capacity_bytes)
    except Exception:  # older jaxlib / interpret mode
        return 64 << 20


def _pick_m_tile(M, bytes_per_m, quantum, vmem_cap):
    """VMEM-budget-driven tile along the flattened output-pixel axis M.

    bytes_per_m: HBM<->VMEM bytes moved per unit of M per grid step
                 (double-buffered input + output tiles).
    quantum:     128 when M lives on the lane axis, 8/16 when on sublanes.
    Returns (tile, padded_M).
    """
    if M <= quantum:
        return M, M                        # single block == full dim, no pad
    budget = max(2 << 20, min(vmem_cap // 4, 24 << 20))
    tm = (budget // max(bytes_per_m, 1)) // quantum * quantum
    Mp = _round_up(M, quantum)
    tm = max(quantum, min(tm, 4096, Mp))
    # Keep >= 4 grid steps when there is enough work: gives DMA/compute
    # overlap on every generation and >= 2 steps per TensorCore on v7x.
    if Mp >= 512 and Mp // tm < 4:
        tm = max(quantum, (Mp // 4) // quantum * quantum)
    Mp = _round_up(M, tm)
    return tm, Mp


def _matmul_nt_kernel(w_ref, p_ref, o_ref):
    # Transposed formulation (Cout < 128):
    #   w_ref: (Cout_sub, Kdim)  resident fused weight
    #   p_ref: (Kdim, TM)        im2col patches^T tile (M on lanes)
    #   o_ref: (Cout_sub, TM)
    o_ref[...] = jnp.dot(w_ref[...], p_ref[...],
                         preferred_element_type=jnp.float32).astype(o_ref.dtype)


def _matmul_nn_kernel(p_ref, w_ref, o_ref):
    # Standard formulation (Cout >= 128, Cout tiled on a 2nd grid axis):
    #   p_ref: (TM, Kdim)   im2col patches tile
    #   w_ref: (Kdim, TN)   fused-weight column tile
    #   o_ref: (TM, TN)
    o_ref[...] = jnp.dot(p_ref[...], w_ref[...],
                         preferred_element_type=jnp.float32).astype(o_ref.dtype)


def separable_conv2d(x_nchw, w_dw, w_pw, *, stride=4, padding=0, dilation=1,
                     compute_dtype=None):
    """Matches SeparableConv2d.forward (bias=False).

    x_nchw : (N, Cin, H, W)
    w_dw   : (Cin, 1, K, K)    depthwise (groups=Cin) conv weight (PyTorch OIHW)
    w_pw   : (Cout, Cin, 1, 1) pointwise conv weight (PyTorch OIHW)
    compute_dtype : optional matmul-operand dtype (e.g. jnp.bfloat16);
                    accumulation is always f32, output keeps x's dtype.
    returns: (N, Cout, Ho, Wo)
    """
    N, Cin, H, W = x_nchw.shape
    K = w_dw.shape[-1]
    Cout = w_pw.shape[0]
    Ho = (H + 2 * padding - dilation * (K - 1) - 1) // stride + 1
    Wo = (W + 2 * padding - dilation * (K - 1) - 1) // stride + 1
    KK = K * K
    Kdim = KK * Cin
    M = N * Ho * Wo

    out_dtype = jnp.dtype(x_nchw.dtype)
    cdt = jnp.dtype(compute_dtype) if compute_dtype is not None else out_dtype
    in_isz = cdt.itemsize
    out_isz = out_dtype.itemsize

    # ---- im2col (wrapper-side data movement) --------------------------------
    # TODO(synk): for K>1 with stride<K this still materializes up to K^2
    # duplicated taps in HBM; an in-kernel gather (memory_space=pl.ANY + manual
    # DMA of the K*K strided taps per tile) would remove that duplication.
    # The module default (K=1, stride=4) has zero duplication.
    xp = x_nchw
    if padding:
        xp = jnp.pad(xp, ((0, 0), (0, 0), (padding, padding), (padding, padding)))
    views = []
    for kh in range(K):
        for kw in range(K):
            h0 = kh * dilation
            w0 = kw * dilation
            views.append(xp[:, :, h0:h0 + (Ho - 1) * stride + 1:stride,
                                  w0:w0 + (Wo - 1) * stride + 1:stride])
    # each view: (N, Cin, Ho, Wo)

    # ---- fuse depthwise into pointwise (build in f32, cast once) ------------
    wdw = jnp.transpose(w_dw.reshape(Cin, KK), (1, 0)).astype(jnp.float32)    # (KK, Cin)
    wpw = jnp.transpose(w_pw.reshape(Cout, Cin), (1, 0)).astype(jnp.float32)  # (Cin, Cout)
    w_fused = (wdw[:, :, None] * wpw[None, :, :]).reshape(Kdim, Cout)         # (Kdim, Cout)

    vmem_cap = _vmem_capacity_bytes()

    if Cout < 128:
        # ---- transposed, M-on-lanes formulation -----------------------------
        Cout_sub = _round_up(Cout, 8)
        patches_t = jnp.stack(views, axis=0)                    # (KK, N, Cin, Ho, Wo)
        patches_t = jnp.transpose(patches_t, (0, 2, 1, 3, 4))   # (KK, Cin, N, Ho, Wo)
        patches_t = patches_t.reshape(Kdim, M).astype(cdt)
        w_t = jnp.pad(jnp.transpose(w_fused, (1, 0)),
                      ((0, Cout_sub - Cout), (0, 0))).astype(cdt)   # (Cout_sub, Kdim)

        bytes_per_m = 2 * Kdim * in_isz + 2 * Cout_sub * out_isz
        tm, Mp = _pick_m_tile(M, bytes_per_m, 128, vmem_cap)
        if Mp != M:
            patches_t = jnp.pad(patches_t, ((0, 0), (0, Mp - M)))

        need = (2 * Kdim * tm * in_isz + 2 * Cout_sub * tm * out_isz
                + 2 * Cout_sub * Kdim * in_isz)
        vmem_limit = int(min(max(need + (2 << 20), 16 << 20), (vmem_cap * 3) // 4))

        # TODO(synk): pipeline_mode=pl.Buffered(1) on the constant-index weight
        # spec would halve its VMEM; only matters for very large Kdim on v7x.
        out_t = pl.pallas_call(
            _matmul_nt_kernel,
            out_shape=jax.ShapeDtypeStruct((Cout_sub, Mp), out_dtype),
            grid_spec=pltpu.PrefetchScalarGridSpec(
                num_scalar_prefetch=0,
                grid=(Mp // tm,),
                in_specs=[
                    pl.BlockSpec((Cout_sub, Kdim), lambda i: (0, 0)),
                    pl.BlockSpec((Kdim, tm), lambda i: (0, i)),
                ],
                out_specs=pl.BlockSpec((Cout_sub, tm), lambda i: (0, i)),
            ),
            compiler_params=pltpu.CompilerParams(
                dimension_semantics=("parallel",),
                vmem_limit_bytes=vmem_limit),
        )(w_t, patches_t)

        out = out_t[:Cout, :M].reshape(Cout, N, Ho, Wo)
        return jnp.transpose(out, (1, 0, 2, 3))                  # NCHW

    # ---- Cout >= 128: standard layout, Cout tiled on a second grid axis -----
    sub_q = 16 if in_isz == 2 else 8
    patches = jnp.stack(views, axis=1)                           # (N, KK, Cin, Ho, Wo)
    patches = jnp.transpose(patches, (0, 3, 4, 1, 2))            # (N, Ho, Wo, KK, Cin)
    patches = patches.reshape(M, Kdim).astype(cdt)

    Coutp = _round_up(Cout, 128)
    tn = min(512, Coutp)
    while Coutp % tn:
        tn -= 128
    w_f = jnp.pad(w_fused, ((0, 0), (0, Coutp - Cout))).astype(cdt)   # (Kdim, Coutp)

    bytes_per_m = 2 * Kdim * in_isz + 2 * tn * out_isz
    tm, Mp = _pick_m_tile(M, bytes_per_m, sub_q, vmem_cap)
    if Mp != M:
        patches = jnp.pad(patches, ((0, Mp - M), (0, 0)))

    need = (2 * tm * Kdim * in_isz + 2 * Kdim * tn * in_isz
            + 2 * tm * tn * out_isz)
    vmem_limit = int(min(max(need + (2 << 20), 16 << 20), (vmem_cap * 3) // 4))

    out = pl.pallas_call(
        _matmul_nn_kernel,
        out_shape=jax.ShapeDtypeStruct((Mp, Coutp), out_dtype),
        grid_spec=pltpu.PrefetchScalarGridSpec(
            num_scalar_prefetch=0,
            grid=(Mp // tm, Coutp // tn),
            in_specs=[
                pl.BlockSpec((tm, Kdim), lambda i, j: (i, 0)),
                pl.BlockSpec((Kdim, tn), lambda i, j: (0, j)),
            ],
            out_specs=pl.BlockSpec((tm, tn), lambda i, j: (i, j)),
        ),
        compiler_params=pltpu.CompilerParams(
            dimension_semantics=("parallel", "parallel"),
            vmem_limit_bytes=vmem_limit),
    )(patches, w_f)

    out = out[:M, :Cout].reshape(N, Ho, Wo, Cout)
    return jnp.transpose(out, (0, 3, 1, 2))                      # NCHW


def _reference(x, w_dw, w_pw, stride, padding, dilation):
    Cin = x.shape[1]
    y = jax.lax.conv_general_dilated(
        x, w_dw, window_strides=(stride, stride),
        padding=[(padding, padding), (padding, padding)],
        rhs_dilation=(dilation, dilation),
        dimension_numbers=("NCHW", "OIHW", "NCHW"),
        feature_group_count=Cin)
    return jax.lax.conv_general_dilated(
        y, w_pw, window_strides=(1, 1), padding=[(0, 0), (0, 0)],
        dimension_numbers=("NCHW", "OIHW", "NCHW"))


if __name__ == "__main__":
    key = jax.random.PRNGKey(0)
    keys = jax.random.split(key, 12)

    # --- case 1: module defaults (K=1, stride=4, pad=0), f32, Cout<128 ------
    N, Cin, Cout, H, W = 2, 4, 8, 16, 16
    x = jax.random.normal(keys[0], (N, Cin, H, W), dtype=jnp.float32)
    w_dw = 0.1 * jax.random.normal(keys[1], (Cin, 1, 1, 1), dtype=jnp.float32)
    w_pw = 0.1 * jax.random.normal(keys[2], (Cout, Cin, 1, 1), dtype=jnp.float32)
    out = jax.block_until_ready(separable_conv2d(x, w_dw, w_pw, stride=4))
    ref = _reference(x, w_dw, w_pw, 4, 0, 1)
    assert out.shape == ref.shape, (out.shape, ref.shape)
    assert jnp.allclose(out, ref, atol=2e-5, rtol=2e-5)

    # --- case 2: K=3, stride=2, padding=1 (im2col + weight fusion), f32 -----
    x2 = jax.random.normal(keys[3], (N, Cin, H, W), dtype=jnp.float32)
    w_dw2 = 0.1 * jax.random.normal(keys[4], (Cin, 1, 3, 3), dtype=jnp.float32)
    w_pw2 = 0.1 * jax.random.normal(keys[5], (Cout, Cin, 1, 1), dtype=jnp.float32)
    out2 = jax.block_until_ready(
        separable_conv2d(x2, w_dw2, w_pw2, stride=2, padding=1))
    ref2 = _reference(x2, w_dw2, w_pw2, 2, 1, 1)
    assert out2.shape == ref2.shape, (out2.shape, ref2.shape)
    assert jnp.allclose(out2, ref2, atol=2e-5, rtol=2e-5)

    # --- case 3: bf16 operands, larger spatial (multi-step lane-tiled grid) -
    N3, Cin3, Cout3, H3, W3 = 2, 8, 8, 64, 64
    x3 = jax.random.normal(keys[6], (N3, Cin3, H3, W3)).astype(jnp.bfloat16)
    w_dw3 = (0.1 * jax.random.normal(keys[7], (Cin3, 1, 1, 1))).astype(jnp.bfloat16)
    w_pw3 = (0.1 * jax.random.normal(keys[8], (Cout3, Cin3, 1, 1))).astype(jnp.bfloat16)
    out3 = jax.block_until_ready(separable_conv2d(x3, w_dw3, w_pw3, stride=4))
    ref3 = _reference(x3.astype(jnp.float32), w_dw3.astype(jnp.float32),
                      w_pw3.astype(jnp.float32), 4, 0, 1)
    assert out3.shape == ref3.shape, (out3.shape, ref3.shape)
    assert jnp.allclose(out3.astype(jnp.float32), ref3, atol=1e-2, rtol=1e-1)

    # --- case 4: Cout >= 128 exercises the Cout-tiled standard layout, f32 --
    N4, Cin4, Cout4 = 2, 8, 256
    x4 = jax.random.normal(keys[9], (N4, Cin4, H, W), dtype=jnp.float32)
    w_dw4 = 0.1 * jax.random.normal(keys[10], (Cin4, 1, 1, 1), dtype=jnp.float32)
    w_pw4 = 0.1 * jax.random.normal(keys[11], (Cout4, Cin4, 1, 1), dtype=jnp.float32)
    out4 = jax.block_until_ready(separable_conv2d(x4, w_dw4, w_pw4, stride=4))
    ref4 = _reference(x4, w_dw4, w_pw4, 4, 0, 1)
    assert out4.shape == ref4.shape, (out4.shape, ref4.shape)
    assert jnp.allclose(out4, ref4, atol=2e-5, rtol=2e-5)

    print("KERNEL_OK")
</pallas_src>

<mosaic_0001>
module attributes {stable_mosaic.version = 11 : i64} {
  func.func @_matmul_nt_kernel(%arg0: i32, %arg1: memref<8x4xf32, #tpu.memory_space<vmem>>, %arg2: memref<4x32xf32, #tpu.memory_space<vmem>>, %arg3: memref<8x32xf32, #tpu.memory_space<vmem>>) attributes {dimension_semantics = [#tpu.dimension_semantics<parallel>], iteration_bounds = array<i64: 1>, scalar_prefetch = 0 : i64, scratch_operands = 0 : i64, tpu.core_type = #tpu.core_type<tc>, window_params = [{pipeline_mode = #tpu.pipeline_mode<synchronous>, transform_indices = @transform_0, window_bounds = array<i64: 8, 4>}, {transform_indices = @transform_1, window_bounds = array<i64: 4, 32>}, {transform_indices = @transform_2, window_bounds = array<i64: 8, 32>}]} {
    %c0 = arith.constant 0 : index
    %c0_0 = arith.constant 0 : index
    %0 = vector.load %arg1[%c0, %c0_0] : memref<8x4xf32, #tpu.memory_space<vmem>>, vector<8x4xf32>
    %c0_1 = arith.constant 0 : index
    %c0_2 = arith.constant 0 : index
    %1 = vector.load %arg2[%c0_1, %c0_2] : memref<4x32xf32, #tpu.memory_space<vmem>>, vector<4x32xf32>
    %cst = arith.constant dense<0.000000e+00> : vector<8x32xf32>
    %2 = tpu.matmul %0, %1, %cst {dimension_numbers = #tpu.dot_dimension_numbers<[1], [0], [0], [1], [0, 0, 1, 1], [], []>} : vector<8x4xf32>, vector<4x32xf32>, vector<8x32xf32> -> vector<8x32xf32>
    %c0_3 = arith.constant 0 : index
    %c0_4 = arith.constant 0 : index
    %3 = vector.load %arg3[%c0_3, %c0_4] : memref<8x32xf32, #tpu.memory_space<vmem>>, vector<8x32xf32>
    tpu.vector_store %arg3[%c0_3, %c0_4], %2 {strides = array<i32>} : memref<8x32xf32, #tpu.memory_space<vmem>>, vector<8x32xf32>,
    return
  }
  func.func @transform_0(%arg0: i32) -> (i32, i32) {
    %c0_i32 = arith.constant 0 : i32
    %c0_i32_0 = arith.constant 0 : i32
    %c0_i32_1 = arith.constant 0 : i32
    return %c0_i32, %c0_i32_0 : i32, i32
  }
  func.func @transform_1(%arg0: i32) -> (i32, i32) {
    %c0_i32 = arith.constant 0 : i32
    %c0_i32_0 = arith.constant 0 : i32
    return %c0_i32, %arg0 : i32, i32
  }
  func.func @transform_2(%arg0: i32) -> (i32, i32) {
    %c0_i32 = arith.constant 0 : i32
    %c0_i32_0 = arith.constant 0 : i32
    return %c0_i32, %arg0 : i32, i32
  }
}

</mosaic_0001>

<llo_original>
// kernel: tpu_custom_call.1
$region0: #{tpu_custom_call.1}
  #allocation0 [shape = 'u32[]', space=smem, size = 0x4, offset = 0x4, fixed_abs, tag = 'smem constant byte address 0x4 - core index']
  #allocation1 [shape = 'u32[144,128]{1,0:T(1,128)}', space=vmem, size = 0x12000, scoped, tag = 'internal scratch']
  %s0 = inlined_call_operand.vmem [shape: f32[8,4], index: 0, kind: input, shape index: {}]
  %s1 = inlined_call_operand.vmem [shape: f32[4,32], index: 1, kind: input, shape index: {}]
  %s2 = inlined_call_operand.hbm [shape: f32[8,32], index: 2, kind: output, shape index: {}]
  %s3 = sld [smem:[#allocation0]]
  $region18: #{tpu_custom_call.1} parent=0
    _
  %s5 = ssub.s32 1, %s3
  %s6 = scalar_select 0, %s5, %s3
  $region1: #{tpu_custom_call.1} parent=0
    #allocation2 [shape = 'u8[4096]{0}', space=vmem, size = 0x1000, scoped, tag = 'output window, operand 0, single buffered']
    #allocation3 [shape = 's32[1]{0}', space=sflag, size = 0x4, scoped, tag = 'scoped memory for tpu_custom_call.1']
    %7 = vsyncpa [#allocation3], 0
    // Predicated region
    $region2: #{tpu_custom_call.1} parent=1 // pred_check
      _
    $region3: #{tpu_custom_call.1} parent=1 // pred_check_branch
      %9 = sbr.rel (0) target = $region5
    $region4: #{tpu_custom_call.1} parent=1 // pred_region
      _
    $region5: #{tpu_custom_call.1} parent=1 // pred_fallthru
      _
    // Predicated region
    $region6: #{tpu_custom_call.1} parent=1 // pred_check
      _
    $region7: #{tpu_custom_call.1} parent=1 // pred_check_branch
      %11 = sbr.rel (0) target = $region9
    $region8: #{tpu_custom_call.1} parent=1 // pred_region
      _
    $region9: #{tpu_custom_call.1} parent=1 // pred_fallthru
      _
    %v12 = vld [vmem:[%s0] sm:$0xff]
    %v13 = vld [vmem:[%s1] sm:$0xf]
    %vm14 = vcmask 31744
    %v16 = vsel %vm14, %v12, 0
    %vm18 = vcmask 1043456
    %v20 = vsel %vm18, %v13, 0
    %22 = vmatprep.subr.mxu0 0.0
    %23 = vmatpush1.msra.mxu0 %v20
    %24 = vmatprep.subr.mxu0 0.0
    %25 = vmatpush1.msra.mxu0 0.0
    %26 = vmatprep.subr.mxu0 0.0
    %27 = vmatpush1.msra.mxu0 0.0
    %28 = vmatprep.subr.mxu0 0.0
    %29 = vmatpush1.msra.mxu0 0.0
    %30 = vmatprep.subr.mxu0 0.0
    %31 = vmatpush1.msra.mxu0 0.0
    %32 = vmatprep.subr.mxu0 0.0
    %33 = vmatpush1.msra.mxu0 0.0
    %34 = vmatprep.subr.mxu0 0.0
    %35 = vmatpush1.msra.mxu0 0.0
    %36 = vmatprep.subr.mxu0 0.0
    %37 = vmatpush1.msra.mxu0 0.0
    %38 = vmatprep.subr.mxu0 0.0
    %39 = vmatpush1.msra.mxu0 0.0
    %40 = vmatprep.subr.mxu0 0.0
    %41 = vmatpush1.msra.mxu0 0.0
    %42 = vmatprep.subr.mxu0 0.0
    %43 = vmatpush1.msra.mxu0 0.0
    %44 = vmatprep.subr.mxu0 0.0
    %45 = vmatpush1.msra.mxu0 0.0
    %46 = vmatprep.subr.mxu0 0.0
    %47 = vmatpush1.msra.mxu0 0.0
    %48 = vmatprep.subr.mxu0 0.0
    %49 = vmatpush1.msra.mxu0 0.0
    %50 = vmatprep.subr.mxu0 0.0
    %51 = vmatpush1.msra.mxu0 0.0
    %52 = vmatprep.subr.mxu0 0.0
    %53 = vmatpush1.msra.mxu0 0.0
    %54 = vmatprep.subr.mxu0 0.0
    %55 = vmatpush1.msra.mxu0 0.0
    %56 = vmatprep.subr.mxu0 0.0
    %57 = vmatpush1.msra.mxu0 0.0
    %58 = vmatprep.subr.mxu0 0.0
    %59 = vmatpush1.msra.mxu0 0.0
    %60 = vmatprep.subr.mxu0 0.0
    %61 = vmatpush1.msra.mxu0 0.0
    %62 = vmatprep.subr.mxu0 0.0
    %63 = vmatpush1.msra.mxu0 0.0
    %64 = vmatprep.subr.mxu0 0.0
    %65 = vmatpush1.msra.mxu0 0.0
    %66 = vmatprep.subr.mxu0 0.0
    %67 = vmatpush1.msra.mxu0 0.0
    %68 = vmatprep.subr.mxu0 0.0
    %69 = vmatpush1.msra.mxu0 0.0
    %70 = vmatprep.subr.mxu0 0.0
    %71 = vmatpush1.msra.mxu0 0.0
    %72 = vmatprep.subr.mxu0 0.0
    %73 = vmatpush1.msra.mxu0 0.0
    %74 = vmatprep.subr.mxu0 0.0
    %75 = vmatpush1.msra.mxu0 0.0
    %76 = vmatprep.subr.mxu0 0.0
    %77 = vmatpush1.msra.mxu0 0.0
    %78 = vmatprep.subr.mxu0 0.0
    %79 = vmatpush1.msra.mxu0 0.0
    %80 = vmatprep.subr.mxu0 0.0
    %81 = vmatpush1.msra.mxu0 0.0
    %82 = vmatprep.subr.mxu0 0.0
    %83 = vmatpush1.msra.mxu0 0.0
    %84 = vmatprep.subr.mxu0 0.0
    %85 = vmatpush1.msra.mxu0 0.0
    %86 = vmatprep.mubr.f32.mxu0 0.0
    %87 = vmatmul.mubr.f32.gmra.mrb[0].mxu0 %v16
    %v88 = vpop.f32.mrb[0].mxu0
    %v89 = vadd.f32 0.0, %v88
    %v90 = vpop.f32.mrb[0].mxu0
    %91 = vdwg.mxu0
    %vm92 = vcmask 261120
    %93 = vst.msk [vmem:[#allocation2] sm:$0xff] %vm92, %v89
    // Predicated region
    $region10: #{tpu_custom_call.1} parent=1 // pred_check
      _
    $region11: #{tpu_custom_call.1} parent=1 // pred_check_branch
      %95 = sbr.rel (0) target = $region13
    $region12: #{tpu_custom_call.1} parent=1 // pred_region
      %s97 = ssub.s32 128, 128
      %98 = vsyncadd [#allocation3], %s97
      %s100 = sshll.u32 [#allocation2], 4
      %s101 = int_to_ptr.vmem [resolvable:$true] %s100
      %103 = dma.vmem_to_hbm [thread:$0]  %s101, 128, %s2, [#allocation3]
    $region13: #{tpu_custom_call.1} parent=1 // pred_fallthru
      _
    // Predicated region
    $region14: #{tpu_custom_call.1} parent=1 // pred_check
      _
    $region15: #{tpu_custom_call.1} parent=1 // pred_check_branch
      %105 = sbr.rel (0) target = $region17
    $region16: #{tpu_custom_call.1} parent=1 // pred_region
      %106 = dma.done [#allocation3], 128
    $region17: #{tpu_custom_call.1} parent=1 // pred_fallthru
      _
    %107 = vsyncpa [#allocation3], 1

</llo_original>
